<compile_context>
chip_gen: v6e
topology: v6e:2x2x1
jax: 0.10.0
libtpu: 0.0.40
codegen_flags: <defaults>
</compile_context>

<pallas_src>
import jax
import jax.numpy as jnp
from jax.experimental import pallas as pl
from jax.experimental.pallas import tpu as pltpu


def _round_up(x, m):
    return ((x + m - 1) // m) * m


def _vmem_capacity_bytes():
    """Physical VMEM per TensorCore; conservative (v7x-sized) fallback."""
    try:
        return int(pltpu.get_tpu_info().vmem_capacity_bytes)
    except Exception:
        return 64 << 20


# ---------------------------------------------------------------------------
# Kernel: one fused pass per bags block.
#   h   = ReLU(x @ W1f + b1f)        (encoder Linear; BN1 scale and 1/r folded)
#   L   = logsumexp(h, axis=patch)   (stable; r folded out of the pooling)
#   out = L @ W2f + b2f              (head Linear; BN affines, BN1 shift, r folded)
# ---------------------------------------------------------------------------
def _lse_mil_kernel(x_ref, w1_ref, b1_ref, w2_ref, b2_ref, o_ref):
    tb, n, f = x_ref.shape

    # ---- encoder: Linear (folded) + ReLU ----
    # The (tb, N, F) -> (tb*N, F) collapse keeps the lane dim (F) untouched and
    # is a layout no-op whenever N % 8 == 0 (sublane tiles already line up);
    # the 2-D form feeds Mosaic's 2-D dot_general directly.
    # TODO(synk): for ragged N (N % 8 != 0) this reshape costs a relayout copy;
    #   switch to a batched-einsum / padded-N formulation for that case.
    x = x_ref[...].reshape(tb * n, f)                       # bf16 (or f32)
    h = jnp.dot(x, w1_ref[...], preferred_element_type=jnp.float32)
    h = jnp.maximum(h + b1_ref[...], 0.0)                   # (tb*N, Zp) f32

    # ---- numerically stable log-sum-exp over the patch axis ----
    # (r already folded into W1f/b1f/W2f; all elementwise/EUP math stays f32 —
    #  v5e has no bf16 VPU/EUP.)
    z = h.reshape(tb, n, -1)                                # (tb, N, Zp)
    m = jnp.max(z, axis=1, keepdims=True)                   # (tb, 1, Zp) XLU
    s = jnp.sum(jnp.exp(z - m), axis=1)                     # (tb, Zp)
    lse = jnp.log(s) + m[:, 0, :]                           # (tb, Zp)

    # ---- head: Linear (folded); small, kept in f32 for output accuracy ----
    o_ref[...] = (jnp.dot(lse, w2_ref[...],
                          preferred_element_type=jnp.float32) + b2_ref[...])


def _pick_tb(B, N, F, Zp, OUTp, bag_itemsize, w1_itemsize,
             vmem_budget_bytes, keep_two_steps,
             target_block_bytes=4 << 20, bags_buffers=2):
    """Bags-per-step.  Mem-bound kernel: size the per-step bags DMA in BYTES
    (>= a few MiB ~ 85% of HBM roofline vs ~29% for tiny tiles), subject to a
    per-generation VMEM budget, then sublane-align."""
    row_bytes = N * F * bag_itemsize
    const_bytes = F * Zp * w1_itemsize + Zp * 4 + Zp * OUTp * 4 + OUTp * 4

    def step_bytes(t):
        return (bags_buffers * t * row_bytes    # pipelined bags slabs
                + 2 * t * N * Zp * 4            # h / exp(z-m) f32 temporaries
                + 2 * t * OUTp * 4              # double-buffered output block
                + const_bytes)                  # single-buffered weights/biases

    tb = max(1, pl.cdiv(target_block_bytes, row_bytes))
    tb = min(tb, B)
    # Only v7x (2 TensorCores) benefits from >= 2 grid steps, and only when B
    # is large enough that the split keeps 8-aligned tiles; on v5e/v6e one
    # bigger block is strictly better (fewer ~0.35us/step overheads).
    if keep_two_steps and B >= 16:
        tb = min(tb, B // 2)
    while tb > 1 and step_bytes(tb) > vmem_budget_bytes:
        tb //= 2
    # Sublane-align the lse/output tiles when the block does not cover the
    # whole batch (a full-batch block equals the array dim, which is always
    # layout-legal).  Ragged tb < 8 only happens when a single 8-bag block
    # already busts VMEM (huge N*F) — accepted at a masked-store perf cost.
    if tb < B and tb >= 8:
        tb = (tb // 8) * 8
    return max(1, tb)


def lse_mil_forward(bags, folded_params, n_out, tb=None, bags_buffers=2):
    """bags: [B, N, F]; folded_params from fold_and_pad_params.
    Returns scores [B, n_out] float32."""
    w1f, b1f, w2f, b2f = folded_params
    B, N, F = bags.shape
    Fp, Zp = w1f.shape
    assert Fp == F
    OUTp = w2f.shape[1]

    # Feed the MXU the storage dtype of W1f (bf16 by default): the bags stream
    # (the dominant HBM traffic) is DMAed at half width and multiplied with
    # native bf16 MXU passes; accumulation stays f32 inside the kernel.  In a
    # real deployment bags/W1 would be kept persistently in bf16 in HBM.
    bags = bags.astype(w1f.dtype)
    bag_itemsize = jnp.dtype(bags.dtype).itemsize
    w1_itemsize = jnp.dtype(w1f.dtype).itemsize

    # Per-generation VMEM sizing: v5e/v6e have 128 MiB physical VMEM, v7x has
    # 64 MiB per TensorCore.
    vmem_cap = _vmem_capacity_bytes()
    small_vmem = vmem_cap <= (80 << 20)              # v7x-like
    vmem_budget = (20 << 20) if small_vmem else (64 << 20)
    vmem_limit_cap = (48 << 20) if small_vmem else (100 << 20)

    if tb is None:
        tb = _pick_tb(B, N, F, Zp, OUTp, bag_itemsize, w1_itemsize,
                      vmem_budget_bytes=vmem_budget,
                      keep_two_steps=small_vmem,
                      bags_buffers=bags_buffers)
    B_pad = _round_up(B, tb)
    if B_pad != B:
        bags = jnp.pad(bags, ((0, B_pad - B), (0, 0), (0, 0)))
    grid = (B_pad // tb,)

    # Advisory cost estimate for XLA's scheduler.
    flops = 2 * B_pad * N * F * Zp + 2 * B_pad * Zp * OUTp
    transcendentals = B_pad * N * Zp + B_pad * Zp            # exp + log
    bytes_accessed = (B_pad * N * F * bag_itemsize
                      + F * Zp * w1_itemsize
                      + 4 * (Zp + Zp * OUTp + OUTp + B_pad * OUTp))
    cost = pl.CostEstimate(flops=flops, transcendentals=transcendentals,
                           bytes_accessed=bytes_accessed)

    # Explicit scoped-VMEM limit (generation-aware cap).
    need = (bags_buffers * tb * N * F * bag_itemsize
            + 2 * tb * N * Zp * 4 + 2 * tb * OUTp * 4
            + F * Zp * w1_itemsize + Zp * 4 + Zp * OUTp * 4 + OUTp * 4)
    vmem_limit = int(min(max(2 * need, 32 << 20), vmem_limit_cap))

    def const_spec(shape):
        nd = len(shape)
        # Constant index_map => never re-DMAed; single-buffer it so the VMEM
        # saved funds a bigger bags block instead of a dead second copy.
        return pl.BlockSpec(shape, lambda *_: (0,) * nd,
                            pipeline_mode=pl.Buffered(1))

    bags_spec_kwargs = {}
    if bags_buffers != 2:
        # Perf knob: Buffered(3) keeps the DMA engine busy across step
        # boundaries when VMEM allows (sweep 2 vs 3 on production shapes).
        bags_spec_kwargs["pipeline_mode"] = pl.Buffered(bags_buffers)

    out = pl.pallas_call(
        _lse_mil_kernel,
        out_shape=jax.ShapeDtypeStruct((B_pad, OUTp), jnp.float32),
        grid_spec=pltpu.PrefetchScalarGridSpec(
            num_scalar_prefetch=0,
            grid=grid,
            in_specs=[
                pl.BlockSpec((tb, N, F), lambda i: (i, 0, 0),
                             **bags_spec_kwargs),           # bags (bf16/f32)
                const_spec((F, Zp)),                         # W1 (folded)
                const_spec((1, Zp)),                         # b1 (folded)
                const_spec((Zp, OUTp)),                      # W2 (folded)
                const_spec((1, OUTp)),                       # b2 (folded)
            ],
            out_specs=pl.BlockSpec((tb, OUTp), lambda i: (i, 0)),
        ),
        # If xprof ever shows one v7x TC idle with "parallel", switch this
        # axis to pltpu.CORE_PARALLEL (or an explicit core_map split).
        compiler_params=pltpu.CompilerParams(
            dimension_semantics=("parallel",),
            vmem_limit_bytes=vmem_limit),
        cost_estimate=cost,
    )(bags, w1f, b1f, w2f, b2f)

    return out[:B, :n_out]


def make_raw_params(key, n_feats, z_dim, n_out):
    """Raw parameters mirroring lse_mil.__init__ / initialize_weights.
    Linear: Xavier-normal weight, zero bias.  BN: gamma=1, beta=0; running
    stats given non-trivial (post-training-like) values so the BN folding is
    actually exercised."""
    ks = jax.random.split(key, 6)

    std1 = (2.0 / (n_feats + z_dim)) ** 0.5
    w1 = std1 * jax.random.normal(ks[0], (n_feats, z_dim), jnp.float32)
    b1 = jnp.zeros((z_dim,), jnp.float32)

    std2 = (2.0 / (z_dim + n_out)) ** 0.5
    w2 = std2 * jax.random.normal(ks[1], (z_dim, n_out), jnp.float32)
    b2 = jnp.zeros((n_out,), jnp.float32)

    g1 = jnp.ones((z_dim,), jnp.float32)
    be1 = jnp.zeros((z_dim,), jnp.float32)
    rm1 = 0.1 * jax.random.normal(ks[2], (z_dim,), jnp.float32)
    rv1 = 1.0 + 0.2 * jax.random.uniform(ks[3], (z_dim,), jnp.float32)

    g2 = jnp.ones((z_dim,), jnp.float32)
    be2 = jnp.zeros((z_dim,), jnp.float32)
    rm2 = 0.1 * jax.random.normal(ks[4], (z_dim,), jnp.float32)
    rv2 = 1.0 + 0.2 * jax.random.uniform(ks[5], (z_dim,), jnp.float32)

    return (w1, b1, g1, be1, rm1, rv1, g2, be2, rm2, rv2, w2, b2)


def fold_and_pad_params(raw, r=1.0, eps=1e-5, lane=128,
                        matmul_dtype=jnp.bfloat16):
    """Fold BN affines, biases and the LSE temperature r into the two Linear
    weights, zero-pad the lane dims (Z, n_out) to multiples of 128, and cast
    W1 to the MXU operand dtype (bf16 by default).

    Algebra (eval mode; s1 = g1/sqrt(rv1+eps) > 0, t1 = be1 - rm1*s1, ditto 2):
      h_bn / r = ReLU(x @ (W1*s1/r) + b1*s1/r) + t1/r           (s1, r > 0)
      r*LSE(h_bn/r, patches) = r*L + t1,   L = LSE(ReLU(x@W1f + b1f))
      head  = (r*L + t1)*s2 + t2 applied to W2, b2
            = L @ (r*diag(s2)@W2) + (t1*s2 + t2)@W2 + b2
    so the kernel only sees x, W1f, b1f, W2f, b2f.
    """
    (w1, b1, g1, be1, rm1, rv1, g2, be2, rm2, rv2, w2, b2) = raw
    assert float(r) > 0.0, "r must be positive to fold through ReLU / LSE"
    s1 = g1 / jnp.sqrt(rv1 + eps)
    t1 = be1 - rm1 * s1
    s2 = g2 / jnp.sqrt(rv2 + eps)
    t2 = be2 - rm2 * s2
    # Host-side (eager) check; folding s1/r through ReLU needs positive scale.
    assert bool(jnp.all(s1 > 0)), "ReLU fold requires positive BN1 scale"

    w1f = (w1 * s1[None, :]) / r
    b1f = ((b1 * s1) / r)[None, :]
    w2f = r * (s2[:, None] * w2)
    b2f = ((t1 * s2 + t2) @ w2 + b2)[None, :]   # t1 folded through the LSE

    Z = w1.shape[1]
    n_out = w2.shape[1]
    Zp = _round_up(Z, lane)
    OUTp = _round_up(n_out, lane)
    # NOTE: the contraction dim F is deliberately NOT padded to 128 — padding
    # it would inflate the dominant bags HBM stream by 128/F (mem-bound).
    w1f = jnp.pad(w1f, ((0, 0), (0, Zp - Z))).astype(matmul_dtype)
    b1f = jnp.pad(b1f, ((0, 0), (0, Zp - Z)))
    w2f = jnp.pad(w2f, ((0, Zp - Z), (0, OUTp - n_out)))
    b2f = jnp.pad(b2f, ((0, 0), (0, OUTp - n_out)))
    return (w1f, b1f, w2f, b2f)


def reference_forward(bags, raw, r=1.0, eps=1e-5):
    """Plain-JAX reference following the PyTorch eval-mode forward exactly."""
    (w1, b1, g1, be1, rm1, rv1, g2, be2, rm2, rv2, w2, b2) = raw
    B, N, F = bags.shape
    h = jnp.maximum(bags.reshape(-1, F) @ w1 + b1, 0.0)
    h = (h - rm1) / jnp.sqrt(rv1 + eps) * g1 + be1
    h = h.reshape(B, N, -1)
    lse = r * jax.scipy.special.logsumexp(h / r, axis=1)
    p = (lse - rm2) / jnp.sqrt(rv2 + eps) * g2 + be2
    return p @ w2 + b2


if __name__ == "__main__":
    # Small shapes consistent with the module's forward.
    B, N, F = 2, 8, 32          # bags, patches per bag, input feats
    Z, n_out = 32, 4            # latent dim, output classes
    r = 0.5                     # non-trivial LSE temperature (exercises fold)

    key = jax.random.PRNGKey(0)
    k_bags, k_params = jax.random.split(key)
    bags = jax.random.normal(k_bags, (B, N, F), jnp.float32)

    raw = make_raw_params(k_params, F, Z, n_out)
    ref = reference_forward(bags, raw, r=r)

    # Exact-path check: f32 storage / f32 MXU operands.
    folded_f32 = fold_and_pad_params(raw, r=r, matmul_dtype=jnp.float32)
    out_f32 = jax.block_until_ready(lse_mil_forward(bags, folded_f32, n_out))
    assert out_f32.shape == (B, n_out)
    assert jnp.allclose(out_f32, ref, atol=1e-4, rtol=1e-4), (out_f32, ref)

    # Default perf path: bf16 bags/W1 in HBM, bf16 MXU operands, f32 accumulate.
    folded_bf16 = fold_and_pad_params(raw, r=r, matmul_dtype=jnp.bfloat16)
    out_bf16 = jax.block_until_ready(lse_mil_forward(bags, folded_bf16, n_out))
    assert out_bf16.shape == (B, n_out)
    assert jnp.allclose(out_bf16, ref, atol=5e-2, rtol=5e-2), (out_bf16, ref)

    print("KERNEL_OK")
</pallas_src>

<mosaic_0001>
module attributes {stable_mosaic.version = 11 : i64} {
  func.func @_lse_mil_kernel(%arg0: i32, %arg1: memref<2x8x32xf32, #tpu.memory_space<vmem>>, %arg2: memref<32x128xf32, #tpu.memory_space<vmem>>, %arg3: memref<1x128xf32, #tpu.memory_space<vmem>>, %arg4: memref<128x128xf32, #tpu.memory_space<vmem>>, %arg5: memref<1x128xf32, #tpu.memory_space<vmem>>, %arg6: memref<2x128xf32, #tpu.memory_space<vmem>>) attributes {dimension_semantics = [#tpu.dimension_semantics<parallel>], iteration_bounds = array<i64: 1>, scalar_prefetch = 0 : i64, scratch_operands = 0 : i64, tpu.core_type = #tpu.core_type<tc>, window_params = [{transform_indices = @transform_0, window_bounds = array<i64: 2, 8, 32>}, {pipeline_mode = #tpu.pipeline_mode<synchronous>, transform_indices = @transform_1, window_bounds = array<i64: 32, 128>}, {pipeline_mode = #tpu.pipeline_mode<synchronous>, transform_indices = @transform_2, window_bounds = array<i64: 1, 128>}, {pipeline_mode = #tpu.pipeline_mode<synchronous>, transform_indices = @transform_3, window_bounds = array<i64: 128, 128>}, {pipeline_mode = #tpu.pipeline_mode<synchronous>, transform_indices = @transform_4, window_bounds = array<i64: 1, 128>}, {transform_indices = @transform_5, window_bounds = array<i64: 2, 128>}]} {
    %c0 = arith.constant 0 : index
    %c0_0 = arith.constant 0 : index
    %c0_1 = arith.constant 0 : index
    %0 = vector.load %arg1[%c0, %c0_0, %c0_1] : memref<2x8x32xf32, #tpu.memory_space<vmem>>, vector<2x8x32xf32>
    %1 = vector.shape_cast %0 : vector<2x8x32xf32> to vector<16x32xf32>
    %c0_2 = arith.constant 0 : index
    %c0_3 = arith.constant 0 : index
    %2 = vector.load %arg2[%c0_2, %c0_3] : memref<32x128xf32, #tpu.memory_space<vmem>>, vector<32x128xf32>
    %cst = arith.constant dense<0.000000e+00> : vector<16x128xf32>
    %3 = tpu.matmul %1, %2, %cst {dimension_numbers = #tpu.dot_dimension_numbers<[1], [0], [0], [1], [0, 0, 1, 1], [], []>} : vector<16x32xf32>, vector<32x128xf32>, vector<16x128xf32> -> vector<16x128xf32>
    %c0_4 = arith.constant 0 : index
    %c0_5 = arith.constant 0 : index
    %4 = vector.load %arg3[%c0_4, %c0_5] : memref<1x128xf32, #tpu.memory_space<vmem>>, vector<1x128xf32>
    %5 = vector.broadcast %4 : vector<1x128xf32> to vector<16x128xf32>
    %6 = arith.addf %3, %5 : vector<16x128xf32>
    %cst_6 = arith.constant 0.000000e+00 : f32
    %7 = vector.broadcast %cst_6 : f32 to vector<16x128xf32>
    %8 = arith.maximumf %6, %7 : vector<16x128xf32>
    %9 = vector.shape_cast %8 : vector<16x128xf32> to vector<2x8x128xf32>
    %cst_7 = arith.constant dense<0xFF800000> : vector<2x128xf32>
    %10 = vector.multi_reduction <maximumf>, %9, %cst_7 [1] : vector<2x8x128xf32> to vector<2x128xf32>
    %11 = vector.shape_cast %10 : vector<2x128xf32> to vector<2x1x128xf32>
    %12 = vector.broadcast %11 : vector<2x1x128xf32> to vector<2x8x128xf32>
    %13 = arith.subf %9, %12 : vector<2x8x128xf32>
    %14 = math.exp %13 : vector<2x8x128xf32>
    %cst_8 = arith.constant dense<0.000000e+00> : vector<2x128xf32>
    %15 = vector.multi_reduction <add>, %14, %cst_8 [1] : vector<2x8x128xf32> to vector<2x128xf32>
    %16 = math.log %15 : vector<2x128xf32>
    %17 = vector.shape_cast %11 : vector<2x1x128xf32> to vector<2x128xf32>
    %18 = arith.addf %16, %17 : vector<2x128xf32>
    %c0_9 = arith.constant 0 : index
    %c0_10 = arith.constant 0 : index
    %19 = vector.load %arg4[%c0_9, %c0_10] : memref<128x128xf32, #tpu.memory_space<vmem>>, vector<128x128xf32>
    %cst_11 = arith.constant dense<0.000000e+00> : vector<2x128xf32>
    %20 = tpu.matmul %18, %19, %cst_11 {dimension_numbers = #tpu.dot_dimension_numbers<[1], [0], [0], [1], [0, 0, 1, 1], [], []>} : vector<2x128xf32>, vector<128x128xf32>, vector<2x128xf32> -> vector<2x128xf32>
    %c0_12 = arith.constant 0 : index
    %c0_13 = arith.constant 0 : index
    %21 = vector.load %arg5[%c0_12, %c0_13] : memref<1x128xf32, #tpu.memory_space<vmem>>, vector<1x128xf32>
    %22 = vector.broadcast %21 : vector<1x128xf32> to vector<2x128xf32>
    %23 = arith.addf %20, %22 : vector<2x128xf32>
    %c0_14 = arith.constant 0 : index
    %c0_15 = arith.constant 0 : index
    %24 = vector.load %arg6[%c0_14, %c0_15] : memref<2x128xf32, #tpu.memory_space<vmem>>, vector<2x128xf32>
    tpu.vector_store %arg6[%c0_14, %c0_15], %23 {strides = array<i32>} : memref<2x128xf32, #tpu.memory_space<vmem>>, vector<2x128xf32>,
    return
  }
  func.func @transform_0(%arg0: i32) -> (i32, i32, i32) {
    %c0_i32 = arith.constant 0 : i32
    %c0_i32_0 = arith.constant 0 : i32
    %c0_i32_1 = arith.constant 0 : i32
    return %arg0, %c0_i32, %c0_i32_0 : i32, i32, i32
  }
  func.func @transform_1(%arg0: i32) -> (i32, i32) {
    %c0_i32 = arith.constant 0 : i32
    %c0_i32_0 = arith.constant 0 : i32
    %c0_i32_1 = arith.constant 0 : i32
    return %c0_i32, %c0_i32_0 : i32, i32
  }
  func.func @transform_2(%arg0: i32) -> (i32, i32) {
    %c0_i32 = arith.constant 0 : i32
    %c0_i32_0 = arith.constant 0 : i32
    %c0_i32_1 = arith.constant 0 : i32
    return %c0_i32, %c0_i32_0 : i32, i32
  }
  func.func @transform_3(%arg0: i32) -> (i32, i32) {
    %c0_i32 = arith.constant 0 : i32
    %c0_i32_0 = arith.constant 0 : i32
    %c0_i32_1 = arith.constant 0 : i32
    return %c0_i32, %c0_i32_0 : i32, i32
  }
  func.func @transform_4(%arg0: i32) -> (i32, i32) {
    %c0_i32 = arith.constant 0 : i32
    %c0_i32_0 = arith.constant 0 : i32
    %c0_i32_1 = arith.constant 0 : i32
    return %c0_i32, %c0_i32_0 : i32, i32
  }
  func.func @transform_5(%arg0: i32) -> (i32, i32) {
    %c0_i32 = arith.constant 0 : i32
    %c0_i32_0 = arith.constant 0 : i32
    return %arg0, %c0_i32 : i32, i32
  }
}

</mosaic_0001>

<llo_original>
// kernel: tpu_custom_call.1
$region0: #{tpu_custom_call.1}
  #allocation0 [shape = 'u32[]', space=smem, size = 0x4, offset = 0x4, fixed_abs, tag = 'smem constant byte address 0x4 - core index']
  #allocation1 [shape = 'u32[144,128]{1,0:T(1,128)}', space=vmem, size = 0x12000, scoped, tag = 'internal scratch']
  %s0 = inlined_call_operand.hbm [shape: f32[2,8,32], index: 0, kind: input, shape index: {}]
  %s1 = inlined_call_operand.hbm [shape: f32[32,128], index: 1, kind: input, shape index: {}]
  %s2 = inlined_call_operand.vmem [shape: f32[1,128], index: 2, kind: input, shape index: {}]
  %s3 = inlined_call_operand.hbm [shape: f32[128,128], index: 3, kind: input, shape index: {}]
  %s4 = inlined_call_operand.vmem [shape: f32[1,128], index: 4, kind: input, shape index: {}]
  %s5 = inlined_call_operand.hbm [shape: f32[2,128], index: 5, kind: output, shape index: {}]
  %s6 = sld [smem:[#allocation0]]
  $region42: #{tpu_custom_call.1} parent=0
    _
  %s8 = ssub.s32 1, %s6
  %s9 = scalar_select 0, %s8, %s6
  $region1: #{tpu_custom_call.1} parent=0
    #allocation2 [shape = 'u8[8192]{0}', space=vmem, size = 0x2000, scoped, tag = 'input window, operand 0, single buffered']
    #allocation3 [shape = 's32[1]{0}', space=sflag, size = 0x4, scoped, tag = 'scoped memory for tpu_custom_call.1']
    #allocation4 [shape = 's32[1]{0}', space=sflag, size = 0x4, scoped, tag = 'scoped memory for tpu_custom_call.1']
    #allocation5 [shape = 'u8[16384]{0}', space=vmem, size = 0x4000, scoped, tag = 'input window, operand 1, single buffered']
    #allocation6 [shape = 's32[1]{0}', space=sflag, size = 0x4, scoped, tag = 'scoped memory for tpu_custom_call.1']
    #allocation7 [shape = 'u8[65536]{0}', space=vmem, size = 0x10000, scoped, tag = 'input window, operand 3, single buffered']
    #allocation8 [shape = 'u8[1024]{0}', space=vmem, size = 0x400, scoped, tag = 'output window, operand 0, single buffered']
    %10 = vsyncpa [#allocation3], 0
    %11 = vsyncpa [#allocation6], 0
    %12 = vsyncpa [#allocation4], 0
    // Predicated region
    $region2: #{tpu_custom_call.1} parent=1 // pred_check
      _
    $region3: #{tpu_custom_call.1} parent=1 // pred_check_branch
      %14 = sbr.rel (0) target = $region5
    $region4: #{tpu_custom_call.1} parent=1 // pred_region
      %s16 = ssub.s32 256, 256
      %17 = vsyncadd [#allocation3], %s16
      %s18 = sshll.u32 [#allocation2], 4
      %s19 = int_to_ptr.vmem [resolvable:$true] %s18
      %24 = dma.hbm_to_vmem [thread:$0]  %s0, 256, %s19, [#allocation3], 128, 128, 8
    $region5: #{tpu_custom_call.1} parent=1 // pred_fallthru
      _
    // Predicated region
    $region6: #{tpu_custom_call.1} parent=1 // pred_check
      _
    $region7: #{tpu_custom_call.1} parent=1 // pred_check_branch
      %26 = sbr.rel (0) target = $region9
    $region8: #{tpu_custom_call.1} parent=1 // pred_region
      %s28 = ssub.s32 512, 512
      %29 = vsyncadd [#allocation6], %s28
      %s30 = sshll.u32 [#allocation5], 4
      %s31 = int_to_ptr.vmem [resolvable:$true] %s30
      %36 = dma.hbm_to_vmem [thread:$0]  %s1, 512, %s31, [#allocation6], 128, 128, 8
    $region9: #{tpu_custom_call.1} parent=1 // pred_fallthru
      _
    // Predicated region
    $region10: #{tpu_custom_call.1} parent=1 // pred_check
      _
    $region11: #{tpu_custom_call.1} parent=1 // pred_check_branch
      %38 = sbr.rel (0) target = $region13
    $region12: #{tpu_custom_call.1} parent=1 // pred_region
      _
    $region13: #{tpu_custom_call.1} parent=1 // pred_fallthru
      _
    // Predicated region
    $region14: #{tpu_custom_call.1} parent=1 // pred_check
      _
    $region15: #{tpu_custom_call.1} parent=1 // pred_check_branch
      %40 = sbr.rel (0) target = $region17
    $region16: #{tpu_custom_call.1} parent=1 // pred_region
      %s42 = ssub.s32 2048, 2048
      %43 = vsyncadd [#allocation6], %s42
      %s44 = sshll.u32 [#allocation7], 4
      %s45 = int_to_ptr.vmem [resolvable:$true] %s44
      %50 = dma.hbm_to_vmem [thread:$0]  %s3, 2048, %s45, [#allocation6], 128, 128, 8
    $region17: #{tpu_custom_call.1} parent=1 // pred_fallthru
      _
    // Predicated region
    $region18: #{tpu_custom_call.1} parent=1 // pred_check
      _
    $region19: #{tpu_custom_call.1} parent=1 // pred_check_branch
      %52 = sbr.rel (0) target = $region21
    $region20: #{tpu_custom_call.1} parent=1 // pred_region
      _
    $region21: #{tpu_custom_call.1} parent=1 // pred_fallthru
      _
    // Predicated region
    $region22: #{tpu_custom_call.1} parent=1 // pred_check
      _
    $region23: #{tpu_custom_call.1} parent=1 // pred_check_branch
      %54 = sbr.rel (0) target = $region25
    $region24: #{tpu_custom_call.1} parent=1 // pred_region
      %55 = dma.done [#allocation3], 256
    $region25: #{tpu_custom_call.1} parent=1 // pred_fallthru
      _
    // Predicated region
    $region26: #{tpu_custom_call.1} parent=1 // pred_check
      _
    $region27: #{tpu_custom_call.1} parent=1 // pred_check_branch
      %57 = sbr.rel (0) target = $region29
    $region28: #{tpu_custom_call.1} parent=1 // pred_region
      %58 = dma.done [#allocation6], 512
    $region29: #{tpu_custom_call.1} parent=1 // pred_fallthru
      _
    // Predicated region
    $region30: #{tpu_custom_call.1} parent=1 // pred_check
      _
    $region31: #{tpu_custom_call.1} parent=1 // pred_check_branch
      %60 = sbr.rel (0) target = $region33
    $region32: #{tpu_custom_call.1} parent=1 // pred_region
      %61 = dma.done [#allocation6], 2048
    $region33: #{tpu_custom_call.1} parent=1 // pred_fallthru
      _
    %v62 = vld [vmem:[#allocation2] sm:$0xff]
    %v63 = vld [vmem:[#allocation2 + $0x8] sm:$0xff]
    %v64 = vld [vmem:[#allocation5] sm:$0xff]
    %v65 = vld [vmem:[#allocation5 + $0x8] sm:$0xff]
    %v66 = vld [vmem:[#allocation5 + $0x10] sm:$0xff]
    %v67 = vld [vmem:[#allocation5 + $0x18] sm:$0xff]
    %v68 = vld [vmem:[%s2] sm:$0x1]
    %v70 = vlaneseq
    %v71 = vshrl.u32 %v70, 7
    %v72 = vsub.s32 0, %v71
    %v73 = vrot.slane %v68, %v72
    %vm75 = vcmask 261120
    %v77 = vsel %vm75, %v62, 0
    %v80 = vsel %vm75, %v63, 0
    %82 = vmatprep.subr.mxu0 0.0
    %83 = vmatpush1.msra.mxu0 0.0
    %84 = vmatprep.subr.mxu0 0.0
    %85 = vmatpush1.msra.mxu0 0.0
    %86 = vmatprep.subr.mxu0 0.0
    %87 = vmatpush1.msra.mxu0 0.0
    %88 = vmatprep.subr.mxu0 0.0
    %89 = vmatpush1.msra.mxu0 0.0
    %90 = vmatprep.subr.mxu0 0.0
    %91 = vmatpush1.msra.mxu0 0.0
    %92 = vmatprep.subr.mxu0 0.0
    %93 = vmatpush1.msra.mxu0 0.0
    %94 = vmatprep.subr.mxu0 0.0
    %95 = vmatpush1.msra.mxu0 0.0
    %96 = vmatprep.subr.mxu0 0.0
    %97 = vmatpush1.msra.mxu0 0.0
    %98 = vmatprep.subr.mxu0 0.0
    %99 = vmatpush1.msra.mxu0 0.0
    %100 = vmatprep.subr.mxu0 0.0
    %101 = vmatpush1.msra.mxu0 0.0
    %102 = vmatprep.subr.mxu0 0.0
    %103 = vmatpush1.msra.mxu0 0.0
    %104 = vmatprep.subr.mxu0 0.0
    %105 = vmatpush1.msra.mxu0 0.0
    %106 = vmatprep.subr.mxu0 0.0
    %107 = vmatpush1.msra.mxu0 %v67
    %108 = vmatprep.subr.mxu0 0.0
    %109 = vmatpush1.msra.mxu0 %v66
    %110 = vmatprep.subr.mxu0 0.0
    %111 = vmatpush1.msra.mxu0 %v65
    %112 = vmatprep.subr.mxu0 0.0
    %113 = vmatpush1.msra.mxu0 %v64
    %114 = vmatprep.subr.mxu0 0.0
    %115 = vmatpush2.msra.mxu0 0.0
    %116 = vmatprep.subr.mxu0 0.0
    %117 = vmatpush2.msra.mxu0 0.0
    %118 = vmatprep.subr.mxu0 0.0
    %119 = vmatpush2.msra.mxu0 0.0
    %120 = vmatprep.subr.mxu0 0.0
    %121 = vmatpush2.msra.mxu0 0.0
    %122 = vmatprep.subr.mxu0 0.0
    %123 = vmatpush2.msra.mxu0 0.0
    %124 = vmatprep.subr.mxu0 0.0
    %125 = vmatpush2.msra.mxu0 0.0
    %126 = vmatprep.subr.mxu0 0.0
    %127 = vmatpush2.msra.mxu0 0.0
    %128 = vmatprep.subr.mxu0 0.0
    %129 = vmatpush2.msra.mxu0 0.0
    %130 = vmatprep.subr.mxu0 0.0
    %131 = vmatpush2.msra.mxu0 0.0
    %132 = vmatprep.subr.mxu0 0.0
    %133 = vmatpush2.msra.mxu0 0.0
    %134 = vmatprep.subr.mxu0 0.0
    %135 = vmatpush2.msra.mxu0 0.0
    %136 = vmatprep.subr.mxu0 0.0
    %137 = vmatpush2.msra.mxu0 0.0
    %138 = vmatprep.subr.mxu0 0.0
    %139 = vmatpush2.msra.mxu0 0.0
    %140 = vmatprep.subr.mxu0 0.0
    %141 = vmatpush2.msra.mxu0 0.0
    %142 = vmatprep.subr.mxu0 0.0
    %143 = vmatpush2.msra.mxu0 0.0
    %144 = vmatprep.subr.mxu0 0.0
    %145 = vmatpush2.msra.mxu0 0.0
    %146 = vmatprep.mubr.f32.mxu0 0.0
    %147 = vmatmul.mubr.f32.gmra.mxu0 %v77
    %v148 = vpop.f32.mrf.mxu0
    %v149 = vadd.f32 %v73, %v148
    %v150 = vpop.f32.mrf.mxu0
    %151 = vmatprep.mubr.f32.mxu0 0.0
    %152 = vmatmul.mubr.f32.gmra.mxu0 %v80
    %v153 = vpop.f32.mrf.mxu0
    %v154 = vadd.f32 %v73, %v153
    %v155 = vpop.f32.mrf.mxu0
    %156 = vdwg.mxu0
    %v157 = vmax.f32 %v149, 0.0
    %v158 = vmax.f32 %v154, 0.0
    %v159 = vrot.slane %v157, 4
    %v160 = vmax.f32 %v157, %v159
    %v161 = vrot.slane %v160, 2
    %v162 = vmax.f32 %v160, %v161
    %v163 = vrot.slane %v162, 1
    %v164 = vmax.f32 %v162, %v163
    %v165 = vrot.slane %v158, 4
    %v166 = vmax.f32 %v158, %v165
    %v167 = vrot.slane %v166, 2
    %v168 = vmax.f32 %v166, %v167
    %v169 = vrot.slane %v168, 1
    %v170 = vmax.f32 %v168, %v169
    %v171 = vsub.f32 %v157, %v164
    %v172 = vsub.f32 %v158, %v170
    %v173 = vmul.f32 %v171, 1.442695
    %v174 = vpow.pop %v173
    %v175 = vmul.f32 %v172, 1.442695
    %v176 = vpow.pop %v175
    %v177 = vrot.slane %v174, 4
    %v178 = vadd.f32 %v174, %v177
    %v179 = vrot.slane %v178, 2
    %v180 = vadd.f32 %v178, %v179
    %v181 = vrot.slane %v180, 1
    %v182 = vadd.f32 %v180, %v181
    %v183 = vrot.slane %v176, 4
    %v184 = vadd.f32 %v176, %v183
    %v185 = vrot.slane %v184, 2
    %v186 = vadd.f32 %v184, %v185
    %v187 = vrot.slane %v186, 1
    %v188 = vadd.f32 %v186, %v187
    %v189 = vlog2.pop %v182
    %v190 = vmul.f32 %v189, 0.6931472
    %v191 = vlog2.pop %v188
    %v192 = vmul.f32 %v191, 0.6931472
    %v193 = vadd.f32 %v190, %v164
    %v194 = vadd.f32 %v192, %v170
    %v195 = vld [vmem:[#allocation7] sm:$0xff]
    %v196 = vld [vmem:[#allocation7 + $0x8] sm:$0xff]
    %v197 = vld [vmem:[#allocation7 + $0x10] sm:$0xff]
    %v198 = vld [vmem:[#allocation7 + $0x18] sm:$0xff]
    %v199 = vld [vmem:[#allocation7 + $0x20] sm:$0xff]
    %v200 = vld [vmem:[#allocation7 + $0x28] sm:$0xff]
    %v201 = vld [vmem:[#allocation7 + $0x30] sm:$0xff]
    %v202 = vld [vmem:[#allocation7 + $0x38] sm:$0xff]
    %v203 = vld [vmem:[#allocation7 + $0x40] sm:$0xff]
    %v204 = vld [vmem:[#allocation7 + $0x48] sm:$0xff]
    %v205 = vld [vmem:[#allocation7 + $0x50] sm:$0xff]
    %v206 = vld [vmem:[#allocation7 + $0x58] sm:$0xff]
    %v207 = vld [vmem:[#allocation7 + $0x60] sm:$0xff]
    %v208 = vld [vmem:[#allocation7 + $0x68] sm:$0xff]
    %v209 = vld [vmem:[#allocation7 + $0x70] sm:$0xff]
    %v210 = vld [vmem:[#allocation7 + $0x78] sm:$0xff]
    %v211 = vld [vmem:[%s4] sm:$0x1]
    %v213 = vlaneseq
    %v214 = vshrl.u32 %v213, 7
    %v215 = vsub.s32 0, %v214
    %v216 = vrot.slane %v211, %v215
    %vm220 = vcmask 1041409
    %v221 = vsel %vm220, %v194, %v193
    %223 = vmatprep.subr.mxu0 0.0
    %224 = vmatpush1.msra.mxu0 %v210
    %225 = vmatprep.subr.mxu0 0.0
    %226 = vmatpush1.msra.mxu0 %v209
    %227 = vmatprep.subr.mxu0 0.0
    %228 = vmatpush1.msra.mxu0 %v208
    %229 = vmatprep.subr.mxu0 0.0
    %230 = vmatpush1.msra.mxu0 %v207
    %231 = vmatprep.subr.mxu0 0.0
    %232 = vmatpush1.msra.mxu0 %v206
    %233 = vmatprep.subr.mxu0 0.0
    %234 = vmatpush1.msra.mxu0 %v205
    %235 = vmatprep.subr.mxu0 0.0
    %236 = vmatpush1.msra.mxu0 %v204
    %237 = vmatprep.subr.mxu0 0.0
    %238 = vmatpush1.msra.mxu0 %v203
    %239 = vmatprep.subr.mxu0 0.0
    %240 = vmatpush1.msra.mxu0 %v202
    %241 = vmatprep.subr.mxu0 0.0
    %242 = vmatpush1.msra.mxu0 %v201
    %243 = vmatprep.subr.mxu0 0.0
    %244 = vmatpush1.msra.mxu0 %v200
    %245 = vmatprep.subr.mxu0 0.0
    %246 = vmatpush1.msra.mxu0 %v199
    %247 = vmatprep.subr.mxu0 0.0
    %248 = vmatpush1.msra.mxu0 %v198
    %249 = vmatprep.subr.mxu0 0.0
    %250 = vmatpush1.msra.mxu0 %v197
    %251 = vmatprep.subr.mxu0 0.0
    %252 = vmatpush1.msra.mxu0 %v196
    %253 = vmatprep.subr.mxu0 0.0
    %254 = vmatpush1.msra.mxu0 %v195
    %255 = vmatprep.subr.mxu0 0.0
    %256 = vmatpush2.msra.mxu0 0.0
    %257 = vmatprep.subr.mxu0 0.0
    %258 = vmatpush2.msra.mxu0 0.0
    %259 = vmatprep.subr.mxu0 0.0
    %260 = vmatpush2.msra.mxu0 0.0
    %261 = vmatprep.subr.mxu0 0.0
    %262 = vmatpush2.msra.mxu0 0.0
    %263 = vmatprep.subr.mxu0 0.0
    %264 = vmatpush2.msra.mxu0 0.0
    %265 = vmatprep.subr.mxu0 0.0
    %266 = vmatpush2.msra.mxu0 0.0
    %267 = vmatprep.subr.mxu0 0.0
    %268 = vmatpush2.msra.mxu0 0.0
    %269 = vmatprep.subr.mxu0 0.0
    %270 = vmatpush2.msra.mxu0 0.0
    %271 = vmatprep.subr.mxu0 0.0
    %272 = vmatpush2.msra.mxu0 0.0
    %273 = vmatprep.subr.mxu0 0.0
    %274 = vmatpush2.msra.mxu0 0.0
    %275 = vmatprep.subr.mxu0 0.0
    %276 = vmatpush2.msra.mxu0 0.0
    %277 = vmatprep.subr.mxu0 0.0
    %278 = vmatpush2.msra.mxu0 0.0
    %279 = vmatprep.subr.mxu0 0.0
    %280 = vmatpush2.msra.mxu0 0.0
    %281 = vmatprep.subr.mxu0 0.0
    %282 = vmatpush2.msra.mxu0 0.0
    %283 = vmatprep.subr.mxu0 0.0
    %284 = vmatpush2.msra.mxu0 0.0
    %285 = vmatprep.subr.mxu0 0.0
    %286 = vmatpush2.msra.mxu0 0.0
    %287 = vmatprep.mubr.f32.mxu0 0.0
    %288 = vmatmul.mubr.f32.gmra.mxu0 %v221
    %v289 = vpop.f32.mrf.mxu0
    %v290 = vadd.f32 %v216, %v289
    %v291 = vpop.f32.mrf.mxu0
    %292 = vdwg.mxu0
    %293 = vst [vmem:[#allocation8] sm:$0x3] %v290
    // Predicated region
    $region34: #{tpu_custom_call.1} parent=1 // pred_check
      _
    $region35: #{tpu_custom_call.1} parent=1 // pred_check_branch
      %295 = sbr.rel (0) target = $region37
    $region36: #{tpu_custom_call.1} parent=1 // pred_region
      %s297 = ssub.s32 32, 32
      %298 = vsyncadd [#allocation4], %s297
      %s300 = sshll.u32 [#allocation8], 4
      %s301 = int_to_ptr.vmem [resolvable:$true] %s300
      %303 = dma.vmem_to_hbm [thread:$0]  %s301, 32, %s5, [#allocation4]
    $region37: #{tpu_custom_call.1} parent=1 // pred_fallthru
      _
    // Predicated region
    $region38: #{tpu_custom_call.1} parent=1 // pred_check
      _
    $region39: #{tpu_custom_call.1} parent=1 // pred_check_branch
      %305 = sbr.rel (0) target = $region41
    $region40: #{tpu_custom_call.1} parent=1 // pred_region
      %306 = dma.done [#allocation4], 32
    $region41: #{tpu_custom_call.1} parent=1 // pred_fallthru
      _
    %307 = vsyncpa [#allocation3], 1
    %308 = vsyncpa [#allocation6], 1
    %309 = vsyncpa [#allocation4], 1

</llo_original>
